<compile_context>
chip_gen: v5e
topology: v5e:2x2
jax: 0.10.0
libtpu: 0.0.40
codegen_flags: <defaults>
</compile_context>

<pallas_src>
import functools

import jax
import jax.numpy as jnp
from jax.experimental import pallas as pl
from jax.experimental.pallas import tpu as pltpu

LANE = 128
SUBLANE = 8
MAX_ROW_TILE = 4096            # (4096,128) f32 = 2 MiB per input tile
VMEM_LIMIT_BYTES = 32 * 1024 * 1024
SMALL_INPUT_CUTOFF = 1 << 20   # below this, plain XLA is faster than a kernel launch


def _num_tensorcores():
    """Conservative TensorCore-per-chip query; defaults to 1 (serial) if unknown."""
    try:
        info = pltpu.get_tpu_info()
    except Exception:
        return 1
    for attr in ("num_cores", "num_tensorcores", "tensorcore_count",
                 "core_count", "cores_per_chip", "num_cores_per_chip"):
        val = getattr(info, attr, None)
        if isinstance(val, int) and val in (1, 2):
            return val
    return 1


def _loss_kernel(pred_ref, tgt_ref, out_ref, acc_ref, *,
                 negative_scale, rows, row_tile, blocks_per_core, nblocks,
                 split_cores, needs_mask):
    if split_cores:
        c = pl.program_id(0)              # TensorCore split (CORE_PARALLEL)
        i = pl.program_id(1)              # streaming reduction axis
        num_i = pl.num_programs(1)
        blk = c * blocks_per_core + i     # unclamped global block index
    else:
        i = pl.program_id(0)
        num_i = pl.num_programs(0)
        blk = i

    @pl.when(i == 0)
    def _init():
        acc_ref[...] = jnp.zeros_like(acc_ref)

    # Cast to f32 in-register (inputs may be bf16/f32); asymmetric abs error.
    p = pred_ref[...].astype(jnp.float32)
    t = tgt_ref[...].astype(jnp.float32)
    diff = p - t
    err = jnp.abs(diff)
    err = jnp.where(diff < 0, err * jnp.float32(negative_scale), err)

    def accumulate(e):
        # (row_tile,128) -> (row_tile/8, 8, 128) is tile-aligned (free); summing the
        # leading axis is pure per-vreg VPU adds into a single (8,128) slab.
        acc_ref[...] += e.reshape(-1, SUBLANE, LANE).sum(axis=0)

    if needs_mask:
        # Only the edge block (and any clamped duplicate blocks from the core split)
        # pays the mask; all steady-state blocks take the bare accumulate path.
        is_edge = blk >= nblocks - 1

        @pl.when(is_edge)
        def _masked():
            row_ids = jax.lax.broadcasted_iota(jnp.int32, err.shape, 0)
            global_row = blk * row_tile + row_ids
            accumulate(jnp.where(global_row < rows, err, 0.0))

        @pl.when(jnp.logical_not(is_edge))
        def _plain():
            accumulate(err)
    else:
        accumulate(err)

    @pl.when(i == num_i - 1)
    def _finalize():
        # One tiny cross-sublane reduce per core; lane/core reduce happens in the
        # wrapper on a (num_cores, 1, 128) array.
        out_ref[...] = jnp.sum(acc_ref[...], axis=0, keepdims=True).reshape(1, 1, LANE)


def custom_mse_loss(prediction, target, negative_scale=2.0, *, use_pallas=None):
    assert prediction.shape == target.shape
    n_elems = prediction.size

    if use_pallas is None:
        use_pallas = n_elems >= SMALL_INPUT_CUTOFF
    if not use_pallas:
        # Small tensors: launch + grid overhead dominates; XLA fuses this trivially.
        return _reference_loss(prediction, target, negative_scale)

    pred = prediction.reshape(-1)   # native dtype; cast happens inside the kernel
    tgt = target.reshape(-1)

    # Pad (only if needed) so a lane/sublane-aligned 2-D reshape is legal. For
    # sub-32-bit dtypes align rows to the packed sublane tile (bf16: 16 rows).
    itemsize = max(1, prediction.dtype.itemsize)
    row_align = SUBLANE * max(1, 4 // itemsize)
    chunk = row_align * LANE
    padded = pl.cdiv(n_elems, chunk) * chunk
    if padded != n_elems:
        pred = jnp.pad(pred, (0, padded - n_elems))
        tgt = jnp.pad(tgt, (0, padded - n_elems))

    rows = padded // LANE
    pred2d = pred.reshape(rows, LANE)
    tgt2d = tgt.reshape(rows, LANE)

    row_tile = min(MAX_ROW_TILE, rows)          # rows is a multiple of row_align
    assert row_tile % SUBLANE == 0
    nblocks = pl.cdiv(rows, row_tile)

    num_cores = _num_tensorcores()
    if nblocks < num_cores:
        num_cores = 1                            # don't duplicate DMA for tiny inputs
    split_cores = num_cores > 1

    blocks_per_core = pl.cdiv(nblocks, num_cores)
    needs_mask = (rows % row_tile != 0) or (num_cores * blocks_per_core != nblocks)

    kernel = functools.partial(
        _loss_kernel,
        negative_scale=float(negative_scale),
        rows=rows,
        row_tile=row_tile,
        blocks_per_core=blocks_per_core,
        nblocks=nblocks,
        split_cores=split_cores,
        needs_mask=needs_mask,
    )

    if split_cores:
        grid = (num_cores, blocks_per_core)

        def in_map(c, i):
            # Clamp fully-out-of-range blocks onto the last real block; the in-kernel
            # row mask zeroes their contribution.
            return (jnp.minimum(c * blocks_per_core + i, nblocks - 1), 0)

        out_map = lambda c, i: (c, 0, 0)
        dim_sem = (pltpu.CORE_PARALLEL, pltpu.ARBITRARY)
    else:
        grid = (nblocks,)
        in_map = lambda i: (i, 0)
        out_map = lambda i: (0, 0, 0)
        dim_sem = (pltpu.ARBITRARY,)

    partials = pl.pallas_call(
        kernel,
        out_shape=jax.ShapeDtypeStruct((num_cores, 1, LANE), jnp.float32),
        grid_spec=pltpu.PrefetchScalarGridSpec(
            num_scalar_prefetch=0,
            grid=grid,
            in_specs=[
                pl.BlockSpec((row_tile, LANE), in_map),
                pl.BlockSpec((row_tile, LANE), in_map),
            ],
            out_specs=pl.BlockSpec((1, 1, LANE), out_map),
            scratch_shapes=[pltpu.VMEM((SUBLANE, LANE), jnp.float32)],
        ),
        compiler_params=pltpu.CompilerParams(
            dimension_semantics=dim_sem,
            vmem_limit_bytes=VMEM_LIMIT_BYTES,
        ),
    )(pred2d, tgt2d)

    return jnp.sum(partials) / jnp.float32(n_elems)


def _reference_loss(prediction, target, negative_scale=2.0):
    diff = prediction.astype(jnp.float32) - target.astype(jnp.float32)
    err = jnp.abs(diff)
    err = jnp.where(diff < 0, err * jnp.float32(negative_scale), err)
    return jnp.mean(err)


if __name__ == "__main__":
    key = jax.random.PRNGKey(0)
    k1, k2, k3, k4 = jax.random.split(key, 4)

    # Small, module-consistent NCHW shapes (force the Pallas path so the kernel runs).
    prediction = jax.random.normal(k1, (2, 4, 16, 16), dtype=jnp.float32)
    target = jax.random.normal(k2, (2, 4, 16, 16), dtype=jnp.float32)
    loss = custom_mse_loss(prediction, target, negative_scale=2.0, use_pallas=True)
    jax.block_until_ready(loss)
    ref = _reference_loss(prediction, target, negative_scale=2.0)
    assert jnp.allclose(loss, ref, rtol=1e-5, atol=1e-6), (loss, ref)

    # Larger case: multi-block streaming, element pad, and the predicated tail mask.
    pred2 = jax.random.normal(k3, (2, 3, 300, 301), dtype=jnp.float32)
    tgt2 = jax.random.normal(k4, (2, 3, 300, 301), dtype=jnp.float32)
    loss2 = custom_mse_loss(pred2, tgt2, negative_scale=2.0, use_pallas=True)
    jax.block_until_ready(loss2)
    ref2 = _reference_loss(pred2, tgt2, negative_scale=2.0)
    assert jnp.allclose(loss2, ref2, rtol=1e-4, atol=1e-6), (loss2, ref2)

    print("KERNEL_OK")
</pallas_src>

<mosaic_0001>
module attributes {stable_mosaic.version = 11 : i64} {
  func.func @_loss_kernel(%arg0: i32, %arg1: memref<16x128xf32, #tpu.memory_space<vmem>>, %arg2: memref<16x128xf32, #tpu.memory_space<vmem>>, %arg3: memref<1x1x128xf32, #tpu.memory_space<vmem>>, %arg4: memref<8x128xf32, #tpu.memory_space<vmem>>) attributes {dimension_semantics = [#tpu.dimension_semantics<arbitrary>], iteration_bounds = array<i64: 1>, scalar_prefetch = 0 : i64, scratch_operands = 1 : i64, tpu.core_type = #tpu.core_type<tc>, window_params = [{transform_indices = @transform_0, window_bounds = array<i64: 16, 128>}, {transform_indices = @transform_1, window_bounds = array<i64: 16, 128>}, {pipeline_mode = #tpu.pipeline_mode<synchronous>, transform_indices = @transform_2, window_bounds = array<i64: 1, 1, 128>}]} {
    %c0_i32 = arith.constant 0 : i32
    %0 = arith.cmpi eq, %arg0, %c0_i32 : i32
    %1 = arith.extui %0 : i1 to i32
    %c0_i32_0 = arith.constant 0 : i32
    %2 = arith.cmpi ne, %1, %c0_i32_0 : i32
    scf.if %2 {
      %cst_12 = arith.constant 0.000000e+00 : f32
      %20 = vector.broadcast %cst_12 : f32 to vector<8x128xf32>
      %c0_13 = arith.constant 0 : index
      %c0_14 = arith.constant 0 : index
      %21 = vector.load %arg4[%c0_13, %c0_14] : memref<8x128xf32, #tpu.memory_space<vmem>>, vector<8x128xf32>
      tpu.vector_store %arg4[%c0_13, %c0_14], %20 {strides = array<i32>} : memref<8x128xf32, #tpu.memory_space<vmem>>, vector<8x128xf32>,
    } else {
    }
    %c0 = arith.constant 0 : index
    %c0_1 = arith.constant 0 : index
    %3 = vector.load %arg1[%c0, %c0_1] : memref<16x128xf32, #tpu.memory_space<vmem>>, vector<16x128xf32>
    %c0_2 = arith.constant 0 : index
    %c0_3 = arith.constant 0 : index
    %4 = vector.load %arg2[%c0_2, %c0_3] : memref<16x128xf32, #tpu.memory_space<vmem>>, vector<16x128xf32>
    %5 = arith.subf %3, %4 : vector<16x128xf32>
    %6 = math.absf %5 : vector<16x128xf32>
    %cst = arith.constant 0.000000e+00 : f32
    %7 = vector.broadcast %cst : f32 to vector<16x128xf32>
    %8 = arith.cmpf olt, %5, %7 : vector<16x128xf32>
    %cst_4 = arith.constant 2.000000e+00 : f32
    %9 = vector.broadcast %cst_4 : f32 to vector<16x128xf32>
    %10 = arith.mulf %6, %9 : vector<16x128xf32>
    %11 = arith.select %8, %10, %6 : vector<16x128xi1>, vector<16x128xf32>
    %c0_5 = arith.constant 0 : index
    %c0_6 = arith.constant 0 : index
    %12 = vector.load %arg4[%c0_5, %c0_6] : memref<8x128xf32, #tpu.memory_space<vmem>>, vector<8x128xf32>
    %13 = vector.shape_cast %11 : vector<16x128xf32> to vector<2x8x128xf32>
    %cst_7 = arith.constant dense<0.000000e+00> : vector<8x128xf32>
    %14 = vector.multi_reduction <add>, %13, %cst_7 [0] : vector<2x8x128xf32> to vector<8x128xf32>
    %15 = arith.addf %12, %14 : vector<8x128xf32>
    %c0_8 = arith.constant 0 : index
    %c0_9 = arith.constant 0 : index
    %16 = vector.load %arg4[%c0_8, %c0_9] : memref<8x128xf32, #tpu.memory_space<vmem>>, vector<8x128xf32>
    tpu.vector_store %arg4[%c0_8, %c0_9], %15 {strides = array<i32>} : memref<8x128xf32, #tpu.memory_space<vmem>>, vector<8x128xf32>,
    %c0_i32_10 = arith.constant 0 : i32
    %17 = arith.cmpi eq, %arg0, %c0_i32_10 : i32
    %18 = arith.extui %17 : i1 to i32
    %c0_i32_11 = arith.constant 0 : i32
    %19 = arith.cmpi ne, %18, %c0_i32_11 : i32
    scf.if %19 {
      %c0_12 = arith.constant 0 : index
      %c0_13 = arith.constant 0 : index
      %20 = vector.load %arg4[%c0_12, %c0_13] : memref<8x128xf32, #tpu.memory_space<vmem>>, vector<8x128xf32>
      %cst_14 = arith.constant dense<0.000000e+00> : vector<128xf32>
      %21 = vector.multi_reduction <add>, %20, %cst_14 [0] : vector<8x128xf32> to vector<128xf32>
      %22 = vector.shape_cast %21 : vector<128xf32> to vector<1x128xf32>
      %23 = vector.shape_cast %22 : vector<1x128xf32> to vector<1x1x128xf32>
      %c0_15 = arith.constant 0 : index
      %c0_16 = arith.constant 0 : index
      %c0_17 = arith.constant 0 : index
      %24 = vector.load %arg3[%c0_15, %c0_16, %c0_17] : memref<1x1x128xf32, #tpu.memory_space<vmem>>, vector<1x1x128xf32>
      tpu.vector_store %arg3[%c0_15, %c0_16, %c0_17], %23 {strides = array<i32>} : memref<1x1x128xf32, #tpu.memory_space<vmem>>, vector<1x1x128xf32>,
    } else {
    }
    return
  }
  func.func @transform_0(%arg0: i32) -> (i32, i32) {
    %c0_i32 = arith.constant 0 : i32
    %c0_i32_0 = arith.constant 0 : i32
    return %arg0, %c0_i32 : i32, i32
  }
  func.func @transform_1(%arg0: i32) -> (i32, i32) {
    %c0_i32 = arith.constant 0 : i32
    %c0_i32_0 = arith.constant 0 : i32
    return %arg0, %c0_i32 : i32, i32
  }
  func.func @transform_2(%arg0: i32) -> (i32, i32, i32) {
    %c0_i32 = arith.constant 0 : i32
    %c0_i32_0 = arith.constant 0 : i32
    %c0_i32_1 = arith.constant 0 : i32
    %c0_i32_2 = arith.constant 0 : i32
    return %c0_i32, %c0_i32_0, %c0_i32_1 : i32, i32, i32
  }
}

</mosaic_0001>

<llo_original>
// kernel: tpu_custom_call.1
$region0: #{tpu_custom_call.1}
  #allocation0 [shape = 'u32[]', space=smem, size = 0x4, offset = 0x4, fixed_abs, tag = 'smem constant byte address 0x4 - core index']
  #allocation1 [shape = 'u32[72,128]{1,0:T(1,128)}', space=vmem, size = 0x9000, scoped, tag = 'internal scratch']
  #allocation2 [shape = 'f32[8,128]{1,0:T(8,128)}', space=vmem, size = 0x1000, scoped, tag = 'scratch operand']
  %s0 = inlined_call_operand.hbm [shape: f32[16,128], index: 0, kind: input, shape index: {}]
  %s1 = inlined_call_operand.hbm [shape: f32[16,128], index: 1, kind: input, shape index: {}]
  %s2 = inlined_call_operand.hbm [shape: f32[1,1,128], index: 2, kind: output, shape index: {}]
  %s3 = sld [smem:[#allocation0]]
  $region34: #{tpu_custom_call.1} parent=0
    _
  %s5 = ssub.s32 1, %s3
  %s6 = scalar_select 0, %s5, %s3
  $region1: #{tpu_custom_call.1} parent=0
    #allocation3 [shape = 'u8[8192]{0}', space=vmem, size = 0x2000, scoped, tag = 'input window, operand 0, single buffered']
    #allocation4 [shape = 's32[1]{0}', space=sflag, size = 0x4, scoped, tag = 'scoped memory for tpu_custom_call.1']
    #allocation5 [shape = 's32[1]{0}', space=sflag, size = 0x4, scoped, tag = 'scoped memory for tpu_custom_call.1']
    #allocation6 [shape = 'u8[8192]{0}', space=vmem, size = 0x2000, scoped, tag = 'input window, operand 1, single buffered']
    #allocation7 [shape = 's32[1]{0}', space=sflag, size = 0x4, scoped, tag = 'scoped memory for tpu_custom_call.1']
    #allocation8 [shape = 'u8[512]{0}', space=vmem, size = 0x400, scoped, tag = 'output window, operand 0, single buffered']
    %7 = vsyncpa [#allocation4], 0
    %8 = vsyncpa [#allocation7], 0
    %9 = vsyncpa [#allocation5], 0
    // Predicated region
    $region2: #{tpu_custom_call.1} parent=1 // pred_check
      _
    $region3: #{tpu_custom_call.1} parent=1 // pred_check_branch
      %11 = sbr.rel (0) target = $region5
    $region4: #{tpu_custom_call.1} parent=1 // pred_region
      %13 = vsyncadd [#allocation4], 0
      %s14 = sshll.u32 %s0, 4
      %s15 = int_to_ptr.hbm [resolvable:$true] %s14
      %s16 = sshll.u32 [#allocation3], 4
      %s17 = int_to_ptr.vmem [resolvable:$true] %s16
      %22 = dma.hbm_to_vmem [thread:$0]  %s15, 256, %s17, [#allocation4], 128, 128, 8
    $region5: #{tpu_custom_call.1} parent=1 // pred_fallthru
      _
    // Predicated region
    $region6: #{tpu_custom_call.1} parent=1 // pred_check
      _
    $region7: #{tpu_custom_call.1} parent=1 // pred_check_branch
      %24 = sbr.rel (0) target = $region9
    $region8: #{tpu_custom_call.1} parent=1 // pred_region
      %26 = vsyncadd [#allocation7], 0
      %s27 = sshll.u32 %s1, 4
      %s28 = int_to_ptr.hbm [resolvable:$true] %s27
      %s29 = sshll.u32 [#allocation6], 4
      %s30 = int_to_ptr.vmem [resolvable:$true] %s29
      %35 = dma.hbm_to_vmem [thread:$0]  %s28, 256, %s30, [#allocation7], 128, 128, 8
    $region9: #{tpu_custom_call.1} parent=1 // pred_fallthru
      _
    // Predicated region
    $region10: #{tpu_custom_call.1} parent=1 // pred_check
      _
    $region11: #{tpu_custom_call.1} parent=1 // pred_check_branch
      %37 = sbr.rel (0) target = $region13
    $region12: #{tpu_custom_call.1} parent=1 // pred_region
      %39 = dma.done [#allocation4], 256
    $region13: #{tpu_custom_call.1} parent=1 // pred_fallthru
      _
    // Predicated region
    $region14: #{tpu_custom_call.1} parent=1 // pred_check
      _
    $region15: #{tpu_custom_call.1} parent=1 // pred_check_branch
      %41 = sbr.rel (0) target = $region17
    $region16: #{tpu_custom_call.1} parent=1 // pred_region
      %43 = dma.done [#allocation7], 256
    $region17: #{tpu_custom_call.1} parent=1 // pred_fallthru
      _
    %p44 = scmp.eq.s32.totalorder 0, 0
    // Predicated region
    $region18: #{tpu_custom_call.1} parent=1 // pred_check
      %p45 = pneg %p44
    $region19: #{tpu_custom_call.1} parent=1 // pred_check_branch
      %47 = sbr.rel (%p45) target = $region21
    $region20: #{tpu_custom_call.1} parent=1 // pred_region
      %48 = vst [vmem:[#allocation2] sm:$0xff] 0.0
    $region21: #{tpu_custom_call.1} parent=1 // pred_fallthru
      _
    %v49 = vld [vmem:[#allocation3] sm:$0xff]
    %v50 = vld [vmem:[#allocation3 + $0x8] sm:$0xff]
    %v51 = vld [vmem:[#allocation6] sm:$0xff]
    %v52 = vld [vmem:[#allocation6 + $0x8] sm:$0xff]
    %v53 = vsub.f32 %v49, %v51
    %v54 = vsub.f32 %v50, %v52
    %v55 = vand.u32 2147483647, %v53
    %v56 = vand.u32 2147483647, %v54
    %vm57 = vcmp.lt.f32.partialorder %v53, 0.0
    %vm58 = vcmp.lt.f32.partialorder %v54, 0.0
    %v59 = vmul.f32 %v55, 2.0
    %v60 = vmul.f32 %v56, 2.0
    %v61 = vsel %vm57, %v59, %v55
    %v62 = vsel %vm58, %v60, %v56
    %v63 = vld [vmem:[#allocation2] sm:$0xff]
    %v64 = vadd.f32 %v61, %v62
    %v65 = vadd.f32 %v63, %v64
    %66 = vst [vmem:[#allocation2] sm:$0xff] %v65
    // Predicated region
    $region22: #{tpu_custom_call.1} parent=1 // pred_check
      %p67 = pneg %p44
    $region23: #{tpu_custom_call.1} parent=1 // pred_check_branch
      %69 = sbr.rel (%p67) target = $region25
    $region24: #{tpu_custom_call.1} parent=1 // pred_region
      %v70 = vld [vmem:[#allocation2] sm:$0xff]
      %v71 = vrot.slane %v70, 4
      %v72 = vadd.f32 %v70, %v71
      %v73 = vrot.slane %v72, 2
      %v74 = vadd.f32 %v72, %v73
      %v75 = vrot.slane %v74, 1
      %v76 = vadd.f32 %v74, %v75
      %77 = vst [vmem:[#allocation8] sm:$0x1] %v76
    $region25: #{tpu_custom_call.1} parent=1 // pred_fallthru
      _
    // Predicated region
    $region26: #{tpu_custom_call.1} parent=1 // pred_check
      _
    $region27: #{tpu_custom_call.1} parent=1 // pred_check_branch
      %79 = sbr.rel (0) target = $region29
    $region28: #{tpu_custom_call.1} parent=1 // pred_region
      %81 = vsyncadd [#allocation5], 0
      %s83 = sshll.u32 [#allocation8], 4
      %s84 = int_to_ptr.vmem [resolvable:$true] %s83
      %s85 = sshll.u32 %s2, 4
      %s86 = int_to_ptr.hbm [resolvable:$true] %s85
      %88 = dma.vmem_to_hbm [thread:$0]  %s84, 16, %s86, [#allocation5]
    $region29: #{tpu_custom_call.1} parent=1 // pred_fallthru
      _
    // Predicated region
    $region30: #{tpu_custom_call.1} parent=1 // pred_check
      _
    $region31: #{tpu_custom_call.1} parent=1 // pred_check_branch
      %90 = sbr.rel (0) target = $region33
    $region32: #{tpu_custom_call.1} parent=1 // pred_region
      %92 = dma.done [#allocation5], 16
    $region33: #{tpu_custom_call.1} parent=1 // pred_fallthru
      _
    %93 = vsyncpa [#allocation4], 1
    %94 = vsyncpa [#allocation7], 1
    %95 = vsyncpa [#allocation5], 1

</llo_original>
